<compile_context>
chip_gen: v6e
topology: v6e:2x2x1
jax: 0.10.0
libtpu: 0.0.40
codegen_flags: <defaults>
</compile_context>

<pallas_src>
import functools

import jax
import jax.numpy as jnp
from jax.experimental import pallas as pl
from jax.experimental.pallas import tpu as pltpu


_VMEM_LIMIT_BYTES = 32 * 1024 * 1024     # scoped VMEM limit (safe on v5e/v6e/v7x)
_VMEM_TILE_BUDGET = 10 * 1024 * 1024     # budget for input double-buffers + acc
_MAX_TILE_N = 131072                     # cap per review (32768-131072 range)


def _round_up(a: int, b: int) -> int:
    return (a + b - 1) // b * b


def _auto_tile_n(n_pad: int, d: int, itemsize_x: int, itemsize_y: int) -> int:
    # 2 pipeline buffers x ((d + 1) rows x itemsize) + 8 f32 accumulator rows
    per_sample = 2 * (d * itemsize_x + itemsize_y) + 8 * 4
    tn = _VMEM_TILE_BUDGET // per_sample
    tn = min(tn, _MAX_TILE_N, n_pad)
    tn = max(128, (tn // 128) * 128)
    return tn


def _make_ccc_moments_kernel(digitize_num: int, value_range, n_samples: int,
                             tile_n: int, tiles_per_core: int):
    d = max(digitize_num, 1)
    lo = float(value_range[0])
    hi = float(value_range[1])

    def kernel(xT_ref, y_ref, out_ref, acc_ref):
        c = pl.program_id(0)          # core / parallel chunk
        i = pl.program_id(1)          # tile within this core's chunk

        @pl.when(i == 0)
        def _init():
            acc_ref[...] = jnp.zeros_like(acc_ref)

        xT = xT_ref[...].astype(jnp.float32)          # (d, tn)
        y = y_ref[...].astype(jnp.float32)            # (1, tn)

        # Tail mask from the global sample index (no padded copies needed):
        # samples past the true N (partial trailing block garbage, or whole
        # clamped duplicate blocks when the core split doesn't divide evenly)
        # are simply excluded, exactly like the PyTorch index_select filter.
        t = c * tiles_per_core + i                    # logical tile index
        base = t * tile_n
        lane = jax.lax.broadcasted_iota(jnp.int32, (1, tile_n), 1)
        in_range = (base + lane) < n_samples
        valid = jnp.logical_and(in_range, y != -5.0)  # (1, tn) bool

        if digitize_num != 1:
            # bins = linspace(lo, hi, d), built in-kernel (no third input).
            bidx = jax.lax.broadcasted_iota(jnp.int32, (d, 1), 0)
            bins = lo + ((hi - lo) / (d - 1)) * bidx.astype(jnp.float32)
            m = jnp.max(xT, axis=0, keepdims=True)                 # (1, tn)
            e = jnp.exp(xT - m)                                    # EUP
            num = jnp.sum(bins * e, axis=0, keepdims=True)         # (1, tn)
            den = jnp.sum(e, axis=0, keepdims=True)                # (1, tn)
            xv = num / den        # one exact divide per sample (VPU)
        else:
            xv = xT                                                # (1, tn)

        zero = jnp.zeros_like(y)
        # jnp.where (not multiply-by-mask): garbage tail data may be Inf/NaN
        # and 0 * Inf would poison the accumulator.
        xs = jnp.where(valid, xv, zero)
        ys = jnp.where(valid, y, zero)
        cnt = valid.astype(jnp.float32)

        # raw-moment rows [n, Sx, Sy, Sxx, Syy, Sxy, 0, 0], padded to a full
        # (8, tn) sublane tile so the accumulate is a single aligned store.
        update = jnp.concatenate(
            [cnt, xs, ys, xs * xs, ys * ys, xs * ys,
             jnp.zeros((2, tile_n), jnp.float32)], axis=0)         # (8, tn)
        acc_ref[...] += update

        @pl.when(i == pl.num_programs(1) - 1)
        def _finalize():
            tot = jnp.sum(acc_ref[...], axis=1, keepdims=True)     # (8, 1)
            out_ref[...] = jnp.broadcast_to(tot[None], (1, 8, 128))

    return kernel


@functools.partial(
    jax.jit,
    static_argnames=("digitize_num", "value_range", "eps", "tile_n",
                     "num_cores", "x_is_transposed", "allow_input_fusion"))
def ccc_loss(x, y, *, digitize_num, value_range=(-1.0, 1.0), eps=1e-8,
             tile_n=None, num_cores=2, x_is_transposed=False,
             allow_input_fusion=False):
    """Pallas implementation of CCCLoss.forward.

    x: (N, digitize_num) logits, or (digitize_num, N) if x_is_transposed=True
       (producers that can emit the lane-dense layout skip the transpose pass)
    y: (N,) labels; entries equal to -5 are masked out (PyTorch index_select)
    returns: scalar () float32 loss (0.0 if fewer than 2 valid samples)
    """
    if digitize_num == 0:
        # TODO(synk): digitize_num == 0 is undefined in the PyTorch reference
        # (bins would be empty and forward would fail); refuse it.
        raise ValueError("digitize_num == 0 is not supported (undefined in "
                         "the reference module)")

    if x_is_transposed:
        d, n = x.shape
    else:
        n, d = x.shape
    assert d == max(digitize_num, 1)

    itemsize_x = jnp.dtype(x.dtype).itemsize
    itemsize_y = jnp.dtype(y.dtype).itemsize

    # Lane-dense layout: samples on lanes, bins on sublanes.  Sample dim is
    # padded only to a multiple of 128 (<=127 cols, fused with the transpose);
    # all further boundary handling is done by in-kernel masking.
    n_pad = _round_up(n, 128)
    if tile_n is None:
        tn = _auto_tile_n(n_pad, d, itemsize_x, itemsize_y)
    else:
        tn = max(128, (int(tile_n) // 128) * 128)
        tn = min(tn, n_pad)

    xT = x if x_is_transposed else jnp.swapaxes(x, 0, 1)     # (d, n), native dtype
    y_row = y.reshape(1, n)
    pad = n_pad - n
    if pad:
        xT = jnp.pad(xT, ((0, 0), (0, pad)))
        y_row = jnp.pad(y_row, ((0, 0), (0, pad)), constant_values=-5.0)

    blocks = pl.cdiv(n_pad, tn)
    num_cores = max(1, int(num_cores))
    tiles_per_core = pl.cdiv(blocks, num_cores)
    last_block = blocks - 1

    def x_index_map(c, i, _tpc=tiles_per_core, _last=last_block):
        return (0, jnp.minimum(c * _tpc + i, _last))

    def y_index_map(c, i, _tpc=tiles_per_core, _last=last_block):
        return (0, jnp.minimum(c * _tpc + i, _last))

    def out_index_map(c, i):
        return (c, 0, 0)

    kernel = _make_ccc_moments_kernel(int(digitize_num), value_range, n, tn,
                                      tiles_per_core)

    cost = pl.CostEstimate(
        flops=int(n_pad * (8 * d + 20)),
        transcendentals=int(n_pad * d if digitize_num != 1 else 0),
        bytes_accessed=int(n_pad * d * itemsize_x + n_pad * itemsize_y
                           + num_cores * 8 * 128 * 4),
    )

    cp_kwargs = dict(dimension_semantics=("parallel", "arbitrary"),
                     vmem_limit_bytes=_VMEM_LIMIT_BYTES)
    if allow_input_fusion:
        # Lets XLA fuse the wrapper transpose/pad into the kernel's input DMA
        # (off by default; enable if profiling shows the transpose pass).
        cp_kwargs["allow_input_fusion"] = [True, True]

    moments = pl.pallas_call(
        kernel,
        out_shape=jax.ShapeDtypeStruct((num_cores, 8, 128), jnp.float32),
        grid_spec=pltpu.PrefetchScalarGridSpec(
            num_scalar_prefetch=0,
            grid=(num_cores, tiles_per_core),
            in_specs=[
                pl.BlockSpec((d, tn), x_index_map),       # x^T tile
                pl.BlockSpec((1, tn), y_index_map),       # y tile
            ],
            out_specs=pl.BlockSpec((1, 8, 128), out_index_map),
            scratch_shapes=[pltpu.VMEM((8, tn), jnp.float32)],
        ),
        compiler_params=pltpu.CompilerParams(**cp_kwargs),
        cost_estimate=cost,
    )(xT, y_row)

    # Combine per-core partial moments and do the cheap scalar math in JAX.
    tot = jnp.sum(moments[:, :, 0], axis=0)                  # (8,)
    nv, sx, sy, sxx, syy, sxy = (tot[k] for k in range(6))

    x_m = sx / nv
    y_m = sy / nv
    # centered sums from raw moments (clamped against FP cancellation)
    vxx = jnp.maximum(sxx - sx * x_m, 0.0)
    vyy = jnp.maximum(syy - sy * y_m, 0.0)
    vxy = sxy - sx * y_m

    rho = vxy / (jnp.sqrt(vxx) * jnp.sqrt(vyy) + eps)
    x_var = vxx / (nv - 1.0)          # torch.std is unbiased (n - 1)
    y_var = vyy / (nv - 1.0)
    ccc = (2.0 * rho * jnp.sqrt(x_var) * jnp.sqrt(y_var)
           / (x_var + y_var + (x_m - y_m) ** 2))
    loss = 1.0 - ccc
    # fewer than 2 valid samples: CCC undefined -> 0 loss (jnp.where discards
    # the NaN computed in the untaken branch; intentional, do not refactor).
    loss = jnp.where(nv < 2.0, jnp.zeros_like(loss), loss)
    return loss


def ccc_loss_ref(x, y, *, digitize_num, value_range=(-1.0, 1.0), eps=1e-8):
    """Pure-JAX reference mirroring the PyTorch forward (masked form)."""
    y = y.reshape(-1).astype(jnp.float32)
    mask = (y != -5.0).astype(jnp.float32)
    n = jnp.sum(mask)
    if digitize_num != 1:
        bins = jnp.linspace(value_range[0], value_range[1],
                            num=digitize_num, dtype=jnp.float32).reshape(1, -1)
        p = jax.nn.softmax(x.astype(jnp.float32), axis=-1)
        xv = jnp.sum(bins * p, axis=-1)
    else:
        xv = x.reshape(-1).astype(jnp.float32)
    x_m = jnp.sum(xv * mask) / n
    y_m = jnp.sum(y * mask) / n
    vx = (xv - x_m) * mask
    vy = (y - y_m) * mask
    sxy, sxx, syy = jnp.sum(vx * vy), jnp.sum(vx * vx), jnp.sum(vy * vy)
    rho = sxy / (jnp.sqrt(sxx) * jnp.sqrt(syy) + eps)
    x_s = jnp.sqrt(sxx / (n - 1.0))
    y_s = jnp.sqrt(syy / (n - 1.0))
    ccc = 2.0 * rho * x_s * y_s / (x_s**2 + y_s**2 + (x_m - y_m) ** 2)
    return 1.0 - ccc


if __name__ == "__main__":
    key = jax.random.PRNGKey(0)

    # --- case 1: digitize_num = 8, small N (single tile, auto tile size) ----
    digitize_num = 8
    N = 16
    kx, ky, k2, k3, k4 = jax.random.split(key, 5)
    x = jax.random.normal(kx, (N, digitize_num), dtype=jnp.float32)
    y = jax.random.uniform(ky, (N,), minval=-1.0, maxval=1.0,
                           dtype=jnp.float32)
    y = y.at[2].set(-5.0).at[5].set(-5.0)   # invalid-sample sentinel

    loss = jax.block_until_ready(ccc_loss(x, y, digitize_num=digitize_num))
    ref = ccc_loss_ref(x, y, digitize_num=digitize_num)
    assert jnp.allclose(loss, ref, atol=1e-4, rtol=1e-4), (loss, ref)

    # --- case 2: digitize_num = 1 (identity path) ---------------------------
    x1 = jax.random.uniform(k2, (N, 1), minval=-1.0, maxval=1.0,
                            dtype=jnp.float32)
    loss1 = jax.block_until_ready(ccc_loss(x1, y, digitize_num=1))
    ref1 = ccc_loss_ref(x1, y, digitize_num=1)
    assert jnp.allclose(loss1, ref1, atol=1e-4, rtol=1e-4), (loss1, ref1)

    # --- case 3: multi-tile, uneven core split (exercises clamp + tail mask)
    N3 = 300
    kx3, ky3 = jax.random.split(k3)
    x3 = jax.random.normal(kx3, (N3, digitize_num), dtype=jnp.float32)
    y3 = jax.random.uniform(ky3, (N3,), minval=-1.0, maxval=1.0,
                            dtype=jnp.float32)
    y3 = y3.at[0].set(-5.0).at[77].set(-5.0).at[250].set(-5.0)
    loss3 = jax.block_until_ready(
        ccc_loss(x3, y3, digitize_num=digitize_num, tile_n=128))
    ref3 = ccc_loss_ref(x3, y3, digitize_num=digitize_num)
    assert jnp.allclose(loss3, ref3, atol=1e-4, rtol=1e-4), (loss3, ref3)

    # --- case 4: pre-transposed producer path (no wrapper transpose) --------
    x4 = jax.random.normal(k4, (digitize_num, N3), dtype=jnp.float32)
    loss4 = jax.block_until_ready(
        ccc_loss(x4, y3, digitize_num=digitize_num, x_is_transposed=True))
    ref4 = ccc_loss_ref(jnp.swapaxes(x4, 0, 1), y3, digitize_num=digitize_num)
    assert jnp.allclose(loss4, ref4, atol=1e-4, rtol=1e-4), (loss4, ref4)

    print("KERNEL_OK")
</pallas_src>

<mosaic_0001>
module attributes {stable_mosaic.version = 11 : i64} {
  func.func @kernel(%arg0: i32, %arg1: i32, %arg2: memref<8x128xf32, #tpu.memory_space<vmem>>, %arg3: memref<1x128xf32, #tpu.memory_space<vmem>>, %arg4: memref<1x8x128xf32, #tpu.memory_space<vmem>>, %arg5: memref<8x128xf32, #tpu.memory_space<vmem>>) attributes {dimension_semantics = [#tpu.dimension_semantics<parallel>, #tpu.dimension_semantics<arbitrary>], iteration_bounds = array<i64: 2, 1>, scalar_prefetch = 0 : i64, scratch_operands = 1 : i64, tpu.core_type = #tpu.core_type<tc>, window_params = [{transform_indices = @transform_0, window_bounds = array<i64: 8, 128>}, {transform_indices = @transform_1, window_bounds = array<i64: 1, 128>}, {transform_indices = @transform_2, window_bounds = array<i64: 1, 8, 128>}]} {
    %c0_i32 = arith.constant 0 : i32
    %0 = arith.cmpi eq, %arg1, %c0_i32 : i32
    %1 = arith.extui %0 : i1 to i32
    %c0_i32_0 = arith.constant 0 : i32
    %2 = arith.cmpi ne, %1, %c0_i32_0 : i32
    scf.if %2 {
      %cst_17 = arith.constant 0.000000e+00 : f32
      %50 = vector.broadcast %cst_17 : f32 to vector<8x128xf32>
      %c0_18 = arith.constant 0 : index
      %c0_19 = arith.constant 0 : index
      %51 = vector.load %arg5[%c0_18, %c0_19] : memref<8x128xf32, #tpu.memory_space<vmem>>, vector<8x128xf32>
      tpu.vector_store %arg5[%c0_18, %c0_19], %50 {strides = array<i32>} : memref<8x128xf32, #tpu.memory_space<vmem>>, vector<8x128xf32>,
    } else {
    }
    %c0 = arith.constant 0 : index
    %c0_1 = arith.constant 0 : index
    %3 = vector.load %arg2[%c0, %c0_1] : memref<8x128xf32, #tpu.memory_space<vmem>>, vector<8x128xf32>
    %c0_2 = arith.constant 0 : index
    %c0_3 = arith.constant 0 : index
    %4 = vector.load %arg3[%c0_2, %c0_3] : memref<1x128xf32, #tpu.memory_space<vmem>>, vector<1x128xf32>
    %c1_i32 = arith.constant 1 : i32
    %5 = arith.muli %arg0, %c1_i32 : i32
    %6 = arith.addi %5, %arg1 : i32
    %c128_i32 = arith.constant 128 : i32
    %7 = arith.muli %6, %c128_i32 : i32
    %8 = tpu.iota {dimensions = array<i32: 1>} : vector<1x128xi32>
    %9 = vector.broadcast %7 : i32 to vector<1x128xi32>
    %10 = arith.addi %9, %8 : vector<1x128xi32>
    %c16_i32 = arith.constant 16 : i32
    %11 = vector.broadcast %c16_i32 : i32 to vector<1x128xi32>
    %12 = arith.cmpi slt, %10, %11 : vector<1x128xi32>
    %cst = arith.constant -5.000000e+00 : f32
    %13 = vector.broadcast %cst : f32 to vector<1x128xf32>
    %14 = arith.cmpf one, %4, %13 : vector<1x128xf32>
    %15 = arith.andi %12, %14 : vector<1x128xi1>
    %16 = tpu.iota {dimensions = array<i32: 0>} : vector<8x1xi32>
    %17 = arith.sitofp %16 : vector<8x1xi32> to vector<8x1xf32>
    %cst_4 = arith.constant 0.285714298 : f32
    %18 = vector.broadcast %cst_4 : f32 to vector<8x1xf32>
    %19 = arith.mulf %18, %17 : vector<8x1xf32>
    %cst_5 = arith.constant -1.000000e+00 : f32
    %20 = vector.broadcast %cst_5 : f32 to vector<8x1xf32>
    %21 = arith.addf %20, %19 : vector<8x1xf32>
    %cst_6 = arith.constant dense<0xFF800000> : vector<128xf32>
    %22 = vector.multi_reduction <maximumf>, %3, %cst_6 [0] : vector<8x128xf32> to vector<128xf32>
    %23 = vector.shape_cast %22 : vector<128xf32> to vector<1x128xf32>
    %24 = vector.broadcast %23 : vector<1x128xf32> to vector<8x128xf32>
    %25 = arith.subf %3, %24 : vector<8x128xf32>
    %26 = math.exp %25 : vector<8x128xf32>
    %27 = vector.broadcast %21 : vector<8x1xf32> to vector<8x128xf32>
    %28 = arith.mulf %27, %26 : vector<8x128xf32>
    %cst_7 = arith.constant dense<0.000000e+00> : vector<128xf32>
    %29 = vector.multi_reduction <add>, %28, %cst_7 [0] : vector<8x128xf32> to vector<128xf32>
    %30 = vector.shape_cast %29 : vector<128xf32> to vector<1x128xf32>
    %cst_8 = arith.constant dense<0.000000e+00> : vector<128xf32>
    %31 = vector.multi_reduction <add>, %26, %cst_8 [0] : vector<8x128xf32> to vector<128xf32>
    %32 = vector.shape_cast %31 : vector<128xf32> to vector<1x128xf32>
    %33 = arith.divf %30, %32 : vector<1x128xf32>
    %cst_9 = arith.constant 0.000000e+00 : f32
    %34 = vector.broadcast %cst_9 : f32 to vector<1x128xf32>
    %35 = arith.select %15, %33, %34 : vector<1x128xi1>, vector<1x128xf32>
    %36 = arith.select %15, %4, %34 : vector<1x128xi1>, vector<1x128xf32>
    %37 = arith.extui %15 : vector<1x128xi1> to vector<1x128xi32>
    %38 = arith.sitofp %37 : vector<1x128xi32> to vector<1x128xf32>
    %39 = arith.mulf %35, %35 : vector<1x128xf32>
    %40 = arith.mulf %36, %36 : vector<1x128xf32>
    %41 = arith.mulf %35, %36 : vector<1x128xf32>
    %cst_10 = arith.constant 0.000000e+00 : f32
    %42 = vector.broadcast %cst_10 : f32 to vector<2x128xf32>
    %43 = tpu.concatenate %38, %35, %36, %39, %40, %41, %42 in 0 : vector<1x128xf32>, vector<1x128xf32>, vector<1x128xf32>, vector<1x128xf32>, vector<1x128xf32>, vector<1x128xf32>, vector<2x128xf32> -> vector<8x128xf32>
    %c0_11 = arith.constant 0 : index
    %c0_12 = arith.constant 0 : index
    %44 = vector.load %arg5[%c0_11, %c0_12] : memref<8x128xf32, #tpu.memory_space<vmem>>, vector<8x128xf32>
    %45 = arith.addf %44, %43 : vector<8x128xf32>
    %c0_13 = arith.constant 0 : index
    %c0_14 = arith.constant 0 : index
    %46 = vector.load %arg5[%c0_13, %c0_14] : memref<8x128xf32, #tpu.memory_space<vmem>>, vector<8x128xf32>
    tpu.vector_store %arg5[%c0_13, %c0_14], %45 {strides = array<i32>} : memref<8x128xf32, #tpu.memory_space<vmem>>, vector<8x128xf32>,
    %c0_i32_15 = arith.constant 0 : i32
    %47 = arith.cmpi eq, %arg1, %c0_i32_15 : i32
    %48 = arith.extui %47 : i1 to i32
    %c0_i32_16 = arith.constant 0 : i32
    %49 = arith.cmpi ne, %48, %c0_i32_16 : i32
    scf.if %49 {
      %c0_17 = arith.constant 0 : index
      %c0_18 = arith.constant 0 : index
      %50 = vector.load %arg5[%c0_17, %c0_18] : memref<8x128xf32, #tpu.memory_space<vmem>>, vector<8x128xf32>
      %cst_19 = arith.constant dense<0.000000e+00> : vector<8xf32>
      %51 = vector.multi_reduction <add>, %50, %cst_19 [1] : vector<8x128xf32> to vector<8xf32>
      %52 = vector.shape_cast %51 : vector<8xf32> to vector<8x1xf32>
      %53 = vector.shape_cast %52 : vector<8x1xf32> to vector<1x8x1xf32>
      %54 = vector.shape_cast %53 : vector<1x8x1xf32> to vector<1x8x1xf32>
      %55 = vector.broadcast %54 : vector<1x8x1xf32> to vector<1x8x128xf32>
      %c0_20 = arith.constant 0 : index
      %c0_21 = arith.constant 0 : index
      %c0_22 = arith.constant 0 : index
      %56 = vector.load %arg4[%c0_20, %c0_21, %c0_22] : memref<1x8x128xf32, #tpu.memory_space<vmem>>, vector<1x8x128xf32>
      tpu.vector_store %arg4[%c0_20, %c0_21, %c0_22], %55 {strides = array<i32>} : memref<1x8x128xf32, #tpu.memory_space<vmem>>, vector<1x8x128xf32>,
    } else {
    }
    return
  }
  func.func @transform_0(%arg0: i32, %arg1: i32) -> (i32, i32) {
    %c1_i32 = arith.constant 1 : i32
    %0 = arith.muli %arg0, %c1_i32 : i32
    %1 = arith.addi %0, %arg1 : i32
    %c0_i32 = arith.constant 0 : i32
    %2 = arith.minsi %1, %c0_i32 : i32
    %c0_i32_0 = arith.constant 0 : i32
    %c0_i32_1 = arith.constant 0 : i32
    return %c0_i32_0, %2 : i32, i32
  }
  func.func @transform_1(%arg0: i32, %arg1: i32) -> (i32, i32) {
    %c1_i32 = arith.constant 1 : i32
    %0 = arith.muli %arg0, %c1_i32 : i32
    %1 = arith.addi %0, %arg1 : i32
    %c0_i32 = arith.constant 0 : i32
    %2 = arith.minsi %1, %c0_i32 : i32
    %c0_i32_0 = arith.constant 0 : i32
    %c0_i32_1 = arith.constant 0 : i32
    return %c0_i32_0, %2 : i32, i32
  }
  func.func @transform_2(%arg0: i32, %arg1: i32) -> (i32, i32, i32) {
    %c0_i32 = arith.constant 0 : i32
    %c0_i32_0 = arith.constant 0 : i32
    %c0_i32_1 = arith.constant 0 : i32
    return %arg0, %c0_i32, %c0_i32_0 : i32, i32, i32
  }
}

</mosaic_0001>

<llo_original>
// kernel: ccc_loss.1
$region0: #{ccc_loss.1}
  #allocation0 [shape = 'u32[]', space=smem, size = 0x4, offset = 0x4, fixed_abs, tag = 'smem constant byte address 0x4 - core index']
  #allocation1 [shape = 'u32[144,128]{1,0:T(1,128)}', space=vmem, size = 0x12000, scoped, tag = 'internal scratch']
  #allocation2 [shape = 'f32[8,128]{1,0:T(8,128)}', space=vmem, size = 0x1000, scoped, tag = 'scratch operand']
  %s0 = inlined_call_operand.vmem [shape: f32[8,128], index: 0, kind: input, shape index: {}]
  %s1 = inlined_call_operand.vmem [shape: f32[1,128], index: 1, kind: input, shape index: {}]
  %s2 = inlined_call_operand.vmem [shape: f32[2,8,128], index: 2, kind: output, shape index: {}]
  %s3 = sld [smem:[#allocation0]]
  $region49: #{ccc_loss.1} parent=0
    _
  %s5 = ssub.s32 1, %s3
  %s6 = scalar_select 0, %s5, %s3
  loop: start=0, step=1, limit=4
  $region2: #{ccc_loss.1} parent=0 // loop_pre_header
    _
  $region3: #{ccc_loss.1} parent=0 // loop_header
    %s8 = sphi 0, %s12
    %p9 = scmp.ge.s32.totalorder %s8, 4
    %s15 = sphi 0, %s27
    %s16 = sphi 0, %s23
    %s17 = sphi 0, %s15
    %s18 = sphi 0, %s16
    %s19 = sphi 0, %s17
    %s20 = sphi 0, %s18
    %s36 = sphi 0, %s38
    %s39 = sphi 0, %s36
    %s40 = sphi 0, %s39
    %s56 = sphi 0, %s40
    %s68 = sphi 0, %s70
    %s71 = sphi 0, %s68
    %s72 = sphi 0, %s71
    %s88 = sphi 0, %s72
    %s94 = sphi 0, %s96
    %s97 = sphi 0, %s94
    %s98 = sphi 0, %s97
    %s114 = sphi 0, %s98
  $region4: #{ccc_loss.1} parent=0 // loop_header_branch
    %11 = sbr.rel (%p9) target = $region8
  $region5: #{ccc_loss.1} parent=0 // loop_body
    %s13 = ssub.s32 %s8, 1
    %s14 = ssub.s32 %s8, 2
    %s21 = sadd.s32 1, %s16
    %p22 = scmp.ge.s32.totalorder %s21, 1
    %s23 = scalar_select %p22, 0, %s21
    %s24 = sadd.s32 1, %s15
    %s25 = scalar_select %p22, %s24, %s15
    %p26 = scmp.ge.s32.totalorder %s25, 2
    %s27 = scalar_select %p26, 0, %s25
    %s28 = sadd.s32 %s15, %s16
    %p29 = scmp.lt.s32.totalorder %s28, 0
    %s30 = scalar_select %p29, %s28, 0
    %s31 = sadd.s32 %s27, %s23
    %p32 = scmp.lt.s32.totalorder %s31, 0
    %s33 = scalar_select %p32, %s31, 0
    %s34 = ssub.s32 %s30, %s33
    %p35 = scmp.eq.s32.totalorder %s34, 0
    %s37 = sadd.s32 %s36, 1
    %s38 = scalar_select %p35, %s36, %s37
    %p41 = pneg %p35
    %p42 = scmp.eq.s32.totalorder %s8, 1
    %p43 = por %p41, %p42
    %p44 = scmp.ne.s32.totalorder %s36, %s39
    %p45 = scmp.eq.s32.totalorder %s8, 0
    %p46 = por %p44, %p45
    %p47 = scmp.ne.s32.totalorder %s36, %s39
    %p48 = scmp.eq.s32.totalorder %s13, 1
    %p49 = por %p47, %p48
    %p50 = scmp.ne.s32.totalorder %s39, %s40
    %p51 = scmp.eq.s32.totalorder %s13, 0
    %p52 = por %p50, %p51
    %p53 = scmp.ne.s32.totalorder %s39, %s40
    %p54 = scmp.eq.s32.totalorder %s14, 1
    %p55 = por %p53, %p54
    %p57 = scmp.ne.s32.totalorder %s40, %s56
    %p58 = scmp.eq.s32.totalorder %s14, 0
    %p59 = por %p57, %p58
    %s60 = sadd.s32 %s15, %s16
    %p61 = scmp.lt.s32.totalorder %s60, 0
    %s62 = scalar_select %p61, %s60, 0
    %s63 = sadd.s32 %s27, %s23
    %p64 = scmp.lt.s32.totalorder %s63, 0
    %s65 = scalar_select %p64, %s63, 0
    %s66 = ssub.s32 %s62, %s65
    %p67 = scmp.eq.s32.totalorder %s66, 0
    %s69 = sadd.s32 %s68, 1
    %s70 = scalar_select %p67, %s68, %s69
    %p73 = pneg %p67
    %p74 = scmp.eq.s32.totalorder %s8, 1
    %p75 = por %p73, %p74
    %p76 = scmp.ne.s32.totalorder %s68, %s71
    %p77 = scmp.eq.s32.totalorder %s8, 0
    %p78 = por %p76, %p77
    %p79 = scmp.ne.s32.totalorder %s68, %s71
    %p80 = scmp.eq.s32.totalorder %s13, 1
    %p81 = por %p79, %p80
    %p82 = scmp.ne.s32.totalorder %s71, %s72
    %p83 = scmp.eq.s32.totalorder %s13, 0
    %p84 = por %p82, %p83
    %p85 = scmp.ne.s32.totalorder %s71, %s72
    %p86 = scmp.eq.s32.totalorder %s14, 1
    %p87 = por %p85, %p86
    %p89 = scmp.ne.s32.totalorder %s72, %s88
    %p90 = scmp.eq.s32.totalorder %s14, 0
    %p91 = por %p89, %p90
    %s92 = ssub.s32 %s15, %s27
    %p93 = scmp.eq.s32.totalorder %s92, 0
    %s95 = sadd.s32 %s94, 1
    %s96 = scalar_select %p93, %s94, %s95
    %p99 = pneg %p93
    %p100 = scmp.eq.s32.totalorder %s8, 1
    %p101 = por %p99, %p100
    %p102 = scmp.ne.s32.totalorder %s94, %s97
    %p103 = scmp.eq.s32.totalorder %s8, 0
    %p104 = por %p102, %p103
    %p105 = scmp.ne.s32.totalorder %s94, %s97
    %p106 = scmp.eq.s32.totalorder %s13, 1
    %p107 = por %p105, %p106
    %p108 = scmp.ne.s32.totalorder %s97, %s98
    %p109 = scmp.eq.s32.totalorder %s13, 0
    %p110 = por %p108, %p109
    %p111 = scmp.ne.s32.totalorder %s97, %s98
    %p112 = scmp.eq.s32.totalorder %s14, 1
    %p113 = por %p111, %p112
    %p115 = scmp.ne.s32.totalorder %s98, %s114
    %p116 = scmp.eq.s32.totalorder %s14, 0
    %p117 = por %p115, %p116
    %p118 = scmp.le.s32.totalorder 1, %s8
    %p119 = scmp.lt.s32.totalorder %s8, 3
    %p120 = pnand %p118, %p119
    %p121 = pneg %p120
    // Predicated region
    $region9: #{ccc_loss.1} parent=5 // pred_check
      _
    $region10: #{ccc_loss.1} parent=5 // pred_check_branch
      %123 = sbr.rel (%p120) target = $region12
    $region11: #{ccc_loss.1} parent=5 // pred_region
      %s124 = ssub.s32 %s8, 1
    $region12: #{ccc_loss.1} parent=5 // pred_fallthru
      _
    %p125 = scmp.lt.s32.totalorder %s8, 2
    // Predicated region
    $region13: #{ccc_loss.1} parent=5 // pred_check
      %p126 = pneg %p125
    $region14: #{ccc_loss.1} parent=5 // pred_check_branch
      %128 = sbr.rel (%p126) target = $region16
    $region15: #{ccc_loss.1} parent=5 // pred_region
      // Predicated region
      $region17: #{ccc_loss.1} parent=15 // pred_check
        %p129 = pneg %p46
      $region18: #{ccc_loss.1} parent=15 // pred_check_branch
        %131 = sbr.rel (%p129) target = $region20
      $region19: #{ccc_loss.1} parent=15 // pred_region
        %s132 = sadd.s32 %s15, %s16
        %p133 = scmp.lt.s32.totalorder %s132, 0
        %s134 = scalar_select %p133, %s132, 0
        %p135 = scmp.lt.s32.totalorder %s134, 0
        %s136 = scalar_select %p135, %s134, 0
        %s137 = smul.addr %s136, 8
        %s138 = scalar_lea.vmem %s0, %s137
        %s139 = sadd.s32 %s15, %s16
        %p140 = scmp.lt.s32.totalorder %s139, 0
        %s141 = scalar_select %p140, %s139, 0
      $region20: #{ccc_loss.1} parent=15 // pred_fallthru
        _
      // Predicated region
      $region21: #{ccc_loss.1} parent=15 // pred_check
        %p142 = pneg %p78
      $region22: #{ccc_loss.1} parent=15 // pred_check_branch
        %144 = sbr.rel (%p142) target = $region24
      $region23: #{ccc_loss.1} parent=15 // pred_region
        %s145 = sadd.s32 %s15, %s16
        %p146 = scmp.lt.s32.totalorder %s145, 0
        %s147 = scalar_select %p146, %s145, 0
        %p148 = scmp.lt.s32.totalorder %s147, 0
        %s149 = scalar_select %p148, %s147, 0
        %s150 = scalar_lea.vmem %s1, %s149
        %s151 = sadd.s32 %s15, %s16
        %p152 = scmp.lt.s32.totalorder %s151, 0
        %s153 = scalar_select %p152, %s151, 0
      $region24: #{ccc_loss.1} parent=15 // pred_fallthru
        _
    $region16: #{ccc_loss.1} parent=5 // pred_fallthru
      _
    %p154 = scmp.le.s32.totalorder 1, %s8
    %p155 = scmp.lt.s32.totalorder %s8, 3
    %p156 = pnand %p154, %p155
    %p157 = pneg %p156
    // Predicated region
    $region25: #{ccc_loss.1} parent=5 // pred_check
      _
    $region26: #{ccc_loss.1} parent=5 // pred_check_branch
      %159 = sbr.rel (%p156) target = $region28
    $region27: #{ccc_loss.1} parent=5 // pred_region
      %s160 = ssub.s32 %s8, 1
      %s161 = sadd.s32 %s17, %s18
      %p162 = scmp.lt.s32.totalorder %s161, 0
      %s163 = scalar_select %p162, %s161, 0
      %p164 = scmp.lt.s32.totalorder %s163, 0
      %s165 = scalar_select %p164, %s163, 0
      %s166 = smul.addr %s165, 8
      %s167 = scalar_lea.vmem %s0, %s166
      %p168 = pneg %p52
      %p169 = pneg %p49
      %s170 = sadd.s32 %s17, %s18
      %p171 = scmp.lt.s32.totalorder %s170, 0
      %s172 = scalar_select %p171, %s170, 0
      %p173 = scmp.lt.s32.totalorder %s172, 0
      %s174 = scalar_select %p173, %s172, 0
      %s175 = scalar_lea.vmem %s1, %s174
      %p176 = pneg %p84
      %p177 = pneg %p81
      %p178 = pneg %p110
      %p179 = pneg %p107
      %p180 = scmp.lt.s32.totalorder %s17, 1
      %s181 = scalar_select %p180, %s17, 1
      %s182 = smul.addr %s181, 8
      %s183 = scalar_lea.vmem %s2, %s182
      %s184 = sadd.s32 %s17, %s18
      %p185 = scmp.lt.s32.totalorder %s184, 0
      %s186 = scalar_select %p185, %s184, 0
      %p187 = scmp.lt.s32.totalorder %s186, 0
      %s188 = scalar_select %p187, %s186, 0
      %s189 = smul.addr %s188, 8
      %s190 = scalar_lea.vmem %s0, %s189
      %s191 = sadd.s32 %s17, %s18
      %p192 = scmp.lt.s32.totalorder %s191, 0
      %s193 = scalar_select %p192, %s191, 0
      %s194 = sadd.s32 %s17, %s18
      %p195 = scmp.lt.s32.totalorder %s194, 0
      %s196 = scalar_select %p195, %s194, 0
      %p197 = scmp.lt.s32.totalorder %s196, 0
      %s198 = scalar_select %p197, %s196, 0
      %s199 = scalar_lea.vmem %s1, %s198
      %s200 = sadd.s32 %s17, %s18
      %p201 = scmp.lt.s32.totalorder %s200, 0
      %s202 = scalar_select %p201, %s200, 0
      %p203 = scmp.lt.s32.totalorder %s17, 1
      %s204 = scalar_select %p203, %s17, 1
      %s205 = smul.addr %s204, 8
      %s206 = scalar_lea.vmem %s2, %s205
      %p207 = scmp.eq.s32.totalorder %s18, 0
      // Predicated region
      $region29: #{ccc_loss.1} parent=27 // pred_check
        %p208 = pneg %p207
      $region30: #{ccc_loss.1} parent=27 // pred_check_branch
        %210 = sbr.rel (%p208) target = $region32
      $region31: #{ccc_loss.1} parent=27 // pred_region
        %211 = vst [vmem:[#allocation2] sm:$0xff] 0.0
      $region32: #{ccc_loss.1} parent=27 // pred_fallthru
        _
      %v212 = vld [vmem:[%s190] sm:$0xff]
      %v213 = vld [vmem:[%s199] sm:$0x1]
      %s214 = sadd.s32 %s17, %s18
      %s215 = smul.u32 %s214, 128
      %v216 = vlaneseq
      %v217 = vand.u32 %v216, 127
      %v218 = vstv %s215
      %v219 = vadd.s32 %v218, %v217
      %vm220 = vcmp.lt.s32.totalorder %v219, 16
      %vm221 = vcmp.ne.f32.partialorder %v213, -5.0
      %vm222 = vmand %vm220, %vm221
      %v223 = vlaneseq
      %v224 = vshrl.u32 %v223, 7
      %v225 = vcvt.s32.f32 %v224
      %v226 = vmul.f32 %v225, 0.2857143
      %v227 = vadd.f32 %v226, -1.0
      %v228 = vrot.slane %v212, 4
      %v229 = vmax.f32 %v212, %v228
      %v230 = vrot.slane %v229, 2
      %v231 = vmax.f32 %v229, %v230
      %v232 = vrot.slane %v231, 1
      %v233 = vmax.f32 %v231, %v232
      %v234 = vsub.f32 %v212, %v233
      %v235 = vmul.f32 %v234, 1.442695
      %v236 = vpow.pop %v235
      %v237 = vmul.f32 %v227, %v236
      %v238 = vrot.slane %v237, 4
      %v239 = vadd.f32 %v237, %v238
      %v240 = vrot.slane %v239, 2
      %v241 = vadd.f32 %v239, %v240
      %v242 = vrot.slane %v241, 1
      %v243 = vadd.f32 %v241, %v242
      %v244 = vrot.slane %v236, 4
      %v245 = vadd.f32 %v236, %v244
      %v246 = vrot.slane %v245, 2
      %v247 = vadd.f32 %v245, %v246
      %v248 = vrot.slane %v247, 1
      %v249 = vadd.f32 %v247, %v248
      %v250 = vrcp.pop %v249
      %v251 = vmul.f32 %v243, %v250
      %v252 = vsel %vm222, %v251, 0.0
      %v253 = vsel %vm222, %v213, 0.0
      %v254 = vsel %vm222, 1, 0
      %v255 = vcvt.s32.f32 %v254
      %v256 = vmul.f32 %v252, %v252
      %v257 = vmul.f32 %v253, %v253
      %v258 = vmul.f32 %v252, %v253
      %v260 = vrot.slane %v252, 7
      %v263 = vrot.slane %v253, 6
      %v266 = vrot.slane %v256, 5
      %v269 = vrot.slane %v257, 4
      %v272 = vrot.slane %v258, 3
      %vm274 = vcmask 1040384
      %v275 = vsel %vm274, %v255, %v260
      %vm276 = vcmask 1041408
      %v277 = vsel %vm276, %v275, %v263
      %vm278 = vcmask 1042432
      %v279 = vsel %vm278, %v277, %v266
      %vm280 = vcmask 1043456
      %v281 = vsel %vm280, %v279, %v269
      %vm282 = vcmask 1044480
      %v283 = vsel %vm282, %v281, %v272
      %vm284 = vcmask 1045504
      %v285 = vsel %vm284, %v283, 0.0
      %v286 = vld [vmem:[#allocation2] sm:$0xff]
      %v287 = vadd.f32 %v286, %v285
      %288 = vst [vmem:[#allocation2] sm:$0xff] %v287
      // Predicated region
      $region33: #{ccc_loss.1} parent=27 // pred_check
        %p289 = pneg %p207
      $region34: #{ccc_loss.1} parent=27 // pred_check_branch
        %291 = sbr.rel (%p289) target = $region36
      $region35: #{ccc_loss.1} parent=27 // pred_region
        %v292 = vld [vmem:[#allocation2] sm:$0xff]
        %293 = vadd.xlane.f32.xlu0 %v292
        %v294 = vpop.xlane.xlu0 %293
        %295 = vst [vmem:[%s206] sm:$0xff] %v294
      $region36: #{ccc_loss.1} parent=27 // pred_fallthru
        _
      %p296 = scmp.lt.s32.totalorder %s17, 1
      %s297 = scalar_select %p296, %s17, 1
      %s298 = smul.addr %s297, 8
      %s299 = scalar_lea.vmem %s2, %s298
      // Predicated region
      $region37: #{ccc_loss.1} parent=27 // pred_check
        %p300 = pneg %p107
      $region38: #{ccc_loss.1} parent=27 // pred_check_branch
        %302 = sbr.rel (%p300) target = $region40
      $region39: #{ccc_loss.1} parent=27 // pred_region
        _
      $region40: #{ccc_loss.1} parent=27 // pred_fallthru
        _
    $region28: #{ccc_loss.1} parent=5 // pred_fallthru
      _
    %p303 = scmp.le.s32.totalorder 2, %s8
    // Predicated region
    $region41: #{ccc_loss.1} parent=5 // pred_check
      %p304 = pneg %p303
    $region42: #{ccc_loss.1} parent=5 // pred_check_branch
      %306 = sbr.rel (%p304) target = $region44
    $region43: #{ccc_loss.1} parent=5 // pred_region
      %s307 = ssub.s32 %s8, 2
      // Predicated region
      $region45: #{ccc_loss.1} parent=43 // pred_check
        %p308 = pneg %p113
      $region46: #{ccc_loss.1} parent=43 // pred_check_branch
        %310 = sbr.rel (%p308) target = $region48
      $region47: #{ccc_loss.1} parent=43 // pred_region
        %p311 = scmp.lt.s32.totalorder %s19, 1
        %s312 = scalar_select %p311, %s19, 1
        %s313 = smul.addr %s312, 8
        %s314 = scalar_lea.vmem %s2, %s313
      $region48: #{ccc_loss.1} parent=43 // pred_fallthru
        _
    $region44: #{ccc_loss.1} parent=5 // pred_fallthru
      _
  $region6: #{ccc_loss.1} parent=0 // loop_footer
    %s12 = sadd.s32 1, %s8
  $region7: #{ccc_loss.1} parent=0 // loop_footer_branch
    %7 = sbr.rel target = $region3
  $region8: #{ccc_loss.1} parent=0 // loop_exit
    _

</llo_original>
